<compile_context>
chip_gen: v7x
topology: tpu7x:2x2x1
jax: 0.10.0
libtpu: 0.0.40
codegen_flags: <defaults>
</compile_context>

<pallas_src>
import functools

import jax
import jax.numpy as jnp
from jax.experimental import pallas as pl
from jax.experimental.pallas import tpu as pltpu

_LANES = 128
_SUBLANE_PACK = 16                       # row multiple: full bf16 vreg packing
_TARGET_BLOCK_BYTES = 4 * 1024 * 1024    # ~4 MiB per input block
_SMALL_ARRAY_BYTES = 256 * 1024          # below this, one full-extent block
_MIN_GRID = 4                            # >=2 steps: pipelining + dual-TC (v7x)
_VMEM_LIMIT_BYTES = 48 * 1024 * 1024


def _swish_kernel(beta_ref, x_ref, o_ref, *, compute_dtype):
    # beta_ref: (1,) f32 scalar in SMEM (the module's learnable parameter)
    # x_ref / o_ref: VMEM tiles of the flattened (rows, 128) input
    half_beta = (0.5 * beta_ref[0]).astype(compute_dtype)
    xf = x_ref[...].astype(compute_dtype)
    # sigmoid(b*x) = 0.5 * (1 + tanh(0.5*b*x)); tanh goes to the EUP slot,
    # leaving only cheap VALU mul/adds -> stays HBM-bound even for bf16 on v7x.
    sig = 0.5 * (jnp.tanh(half_beta * xf) + 1.0)
    o_ref[...] = (xf * sig).astype(o_ref.dtype)


def _pick_tile_rows(rows: int, itemsize: int) -> int:
    """Block row count: ~4 MiB blocks, multiple of 16 rows, never grid=(1,)
    for arrays above a few hundred KiB."""
    bytes_total = rows * _LANES * itemsize
    if bytes_total <= _SMALL_ARRAY_BYTES or rows <= _SUBLANE_PACK:
        return rows                       # tiny activation: one full-extent block
    tile_target = max(
        _SUBLANE_PACK,
        (_TARGET_BLOCK_BYTES // (_LANES * itemsize)) // _SUBLANE_PACK * _SUBLANE_PACK,
    )
    # Keep at least ~_MIN_GRID blocks so DMA/compute overlap and both v7x TCs
    # get work; round the per-block row count up to a multiple of 16.
    tile_for_min_grid = pl.cdiv(pl.cdiv(rows, _MIN_GRID), _SUBLANE_PACK) * _SUBLANE_PACK
    return max(_SUBLANE_PACK, min(tile_target, tile_for_min_grid))


def _swish_2d(x2d: jax.Array, beta_arr: jax.Array, compute_dtype) -> jax.Array:
    rows, _ = x2d.shape
    itemsize = jnp.dtype(x2d.dtype).itemsize
    tile_rows = _pick_tile_rows(rows, itemsize)
    grid = (pl.cdiv(rows, tile_rows),)
    n = rows * _LANES
    cost = pl.CostEstimate(
        flops=5 * n,                       # muls/adds around the tanh
        transcendentals=n,                 # one tanh per element
        bytes_accessed=2 * n * itemsize,   # one read + one write pass
    )
    return pl.pallas_call(
        functools.partial(_swish_kernel, compute_dtype=compute_dtype),
        out_shape=jax.ShapeDtypeStruct(x2d.shape, x2d.dtype),
        grid_spec=pltpu.PrefetchScalarGridSpec(
            num_scalar_prefetch=0,
            grid=grid,
            in_specs=[
                pl.BlockSpec(memory_space=pltpu.SMEM),               # beta scalar
                pl.BlockSpec((tile_rows, _LANES), lambda i: (i, 0)),
            ],
            out_specs=pl.BlockSpec((tile_rows, _LANES), lambda i: (i, 0)),
        ),
        compiler_params=pltpu.CompilerParams(
            # TODO(synk): confirm via xprof that "parallel" shards this row grid
            # across both TensorCores on v7x; if not, switch to pltpu.CORE_PARALLEL.
            dimension_semantics=("parallel",),
            vmem_limit_bytes=_VMEM_LIMIT_BYTES,
        ),
        cost_estimate=cost,
    )(beta_arr, x2d)


@jax.jit
def swish(x: jax.Array, beta) -> jax.Array:
    """Forward of the FFJORD Swish module: x * sigmoid(beta * x)."""
    orig_shape = x.shape
    total = x.size
    # bf16 inputs compute in bf16 (v6e/v7x bf16 VALU+EUP; v5e upcasts
    # internally and stays correct); everything else computes in f32.
    compute_dtype = jnp.bfloat16 if x.dtype == jnp.bfloat16 else jnp.float32
    beta_arr = jnp.asarray(beta, dtype=jnp.float32).reshape((1,))

    flat = x.reshape(-1)
    n_main = (total // _LANES) * _LANES

    if n_main == 0:
        # Whole array smaller than one lane row: plain JAX is cheapest.
        xc = x.astype(compute_dtype)
        sig = jax.nn.sigmoid(beta_arr[0].astype(compute_dtype) * xc)
        return (xc * sig).astype(x.dtype)

    if n_main == total:
        # Lane-aligned fast path: free reshape, no pad, no slice-back.
        x2d = flat.reshape(n_main // _LANES, _LANES)
        return _swish_2d(x2d, beta_arr, compute_dtype).reshape(orig_shape)

    # Lane-unaligned: kernel on the aligned prefix; <128-element tail in plain
    # JAX (avoids the extra full-array HBM passes of pad + slice-back).
    main2d = flat[:n_main].reshape(n_main // _LANES, _LANES)
    out_main = _swish_2d(main2d, beta_arr, compute_dtype).reshape(-1)
    tail = flat[n_main:].astype(compute_dtype)
    beta_c = beta_arr[0].astype(compute_dtype)
    out_tail = (tail * jax.nn.sigmoid(beta_c * tail)).astype(x.dtype)
    return jnp.concatenate([out_main, out_tail]).reshape(orig_shape)


if __name__ == "__main__":
    key = jax.random.PRNGKey(0)

    # Deterministic parameter init matching nn.Parameter(torch.tensor(1.0)).
    beta = jnp.float32(1.0)

    # 1) f32 NCHW activation, lane-aligned fast path.
    x = jax.random.normal(key, (2, 4, 16, 16), dtype=jnp.float32)
    out = jax.block_until_ready(swish(x, beta))
    ref = x * jax.nn.sigmoid(beta * x)
    assert out.shape == x.shape and out.dtype == x.dtype
    assert jnp.allclose(out, ref, atol=1e-5, rtol=1e-5)

    # 2) Lane-unaligned size exercises the tail-split path (no pad/slice-back).
    x_odd = jax.random.normal(jax.random.PRNGKey(1), (2, 3, 7, 5), dtype=jnp.float32)
    out_odd = jax.block_until_ready(swish(x_odd, beta))
    ref_odd = x_odd * jax.nn.sigmoid(beta * x_odd)
    assert out_odd.shape == x_odd.shape and out_odd.dtype == x_odd.dtype
    assert jnp.allclose(out_odd, ref_odd, atol=1e-5, rtol=1e-5)

    # 3) bf16 input exercises the bf16 compute path (v6e/v7x bf16 VALU+EUP).
    x_bf16 = jax.random.normal(jax.random.PRNGKey(2), (2, 4, 16, 16), dtype=jnp.bfloat16)
    out_bf16 = jax.block_until_ready(swish(x_bf16, beta))
    xf32 = x_bf16.astype(jnp.float32)
    ref_bf16 = xf32 * jax.nn.sigmoid(beta * xf32)
    assert out_bf16.shape == x_bf16.shape and out_bf16.dtype == x_bf16.dtype
    assert jnp.allclose(out_bf16.astype(jnp.float32), ref_bf16, atol=3e-2, rtol=3e-2)

    print("KERNEL_OK")
</pallas_src>

<mosaic_0001>
module attributes {stable_mosaic.version = 11 : i64} {
  func.func @_swish_kernel(%arg0: i32, %arg1: memref<1xf32, #tpu.memory_space<smem>>, %arg2: memref<16x128xf32, #tpu.memory_space<vmem>>, %arg3: memref<16x128xf32, #tpu.memory_space<vmem>>) attributes {dimension_semantics = [#tpu.dimension_semantics<parallel>], iteration_bounds = array<i64: 1>, scalar_prefetch = 0 : i64, scratch_operands = 0 : i64, tpu.core_type = #tpu.core_type<tc>, window_params = [{transform_indices = @transform_0, window_bounds = array<i64: 1>}, {transform_indices = @transform_1, window_bounds = array<i64: 16, 128>}, {transform_indices = @transform_2, window_bounds = array<i64: 16, 128>}]} {
    %c0 = arith.constant 0 : index
    %0 = memref.load %arg1[%c0] : memref<1xf32, #tpu.memory_space<smem>>
    %cst = arith.constant 5.000000e-01 : f32
    %1 = arith.mulf %cst, %0 : f32
    %c0_0 = arith.constant 0 : index
    %c0_1 = arith.constant 0 : index
    %2 = vector.load %arg2[%c0_0, %c0_1] : memref<16x128xf32, #tpu.memory_space<vmem>>, vector<16x128xf32>
    %3 = vector.broadcast %1 : f32 to vector<16x128xf32>
    %4 = arith.mulf %3, %2 : vector<16x128xf32>
    %5 = math.tanh %4 : vector<16x128xf32>
    %cst_2 = arith.constant 1.000000e+00 : f32
    %6 = vector.broadcast %cst_2 : f32 to vector<16x128xf32>
    %7 = arith.addf %5, %6 : vector<16x128xf32>
    %cst_3 = arith.constant 5.000000e-01 : f32
    %8 = vector.broadcast %cst_3 : f32 to vector<16x128xf32>
    %9 = arith.mulf %8, %7 : vector<16x128xf32>
    %10 = arith.mulf %2, %9 : vector<16x128xf32>
    %c0_4 = arith.constant 0 : index
    %c0_5 = arith.constant 0 : index
    %11 = vector.load %arg3[%c0_4, %c0_5] : memref<16x128xf32, #tpu.memory_space<vmem>>, vector<16x128xf32>
    tpu.vector_store %arg3[%c0_4, %c0_5], %10 {strides = array<i32>} : memref<16x128xf32, #tpu.memory_space<vmem>>, vector<16x128xf32>,
    return
  }
  func.func @transform_0(%arg0: i32) -> i32 {
    %c0_i32 = arith.constant 0 : i32
    %c0_i32_0 = arith.constant 0 : i32
    return %c0_i32 : i32
  }
  func.func @transform_1(%arg0: i32) -> (i32, i32) {
    %c0_i32 = arith.constant 0 : i32
    %c0_i32_0 = arith.constant 0 : i32
    return %arg0, %c0_i32 : i32, i32
  }
  func.func @transform_2(%arg0: i32) -> (i32, i32) {
    %c0_i32 = arith.constant 0 : i32
    %c0_i32_0 = arith.constant 0 : i32
    return %arg0, %c0_i32 : i32, i32
  }
}

</mosaic_0001>

<llo_original>
// kernel: swish.1
$region0: #{swish.1}
  #allocation0 [shape = 'u32[]', space=smem, size = 0x4, offset = 0x4, fixed_abs, tag = 'smem constant byte address 0x4 - core index']
  #allocation1 [shape = 'u32[144,128]{1,0:T(1,128)}', space=vmem, size = 0x12000, scoped, tag = 'internal scratch']
  #allocation2 [shape = 'f32[1]{0:T(128)S(6)}', space=smem, size = 0x200, scoped, tag = 'scoped memory for swish.1']
  %s0 = inlined_call_operand.<no memory space> [shape: f32[1], index: 0, kind: input, shape index: {}]
  %s1 = inlined_call_operand.vmem [shape: f32[16,128], index: 1, kind: input, shape index: {}]
  %s2 = inlined_call_operand.vmem [shape: f32[16,128], index: 2, kind: output, shape index: {}]
  %s3 = sld [smem:[#allocation0]]
  $region18: #{swish.1} parent=0
    _
  %s5 = ssub.s32 1, %s3
  %s6 = scalar_select 0, %s5, %s3
  %7 = sst [smem:[#allocation2]] %s0
  // Predicated region
  $region2: #{swish.1} parent=0 // pred_check
    _
  $region3: #{swish.1} parent=0 // pred_check_branch
    %9 = sbr.rel (0) target = $region5
  $region4: #{swish.1} parent=0 // pred_region
    _
  $region5: #{swish.1} parent=0 // pred_fallthru
    _
  // Predicated region
  $region6: #{swish.1} parent=0 // pred_check
    _
  $region7: #{swish.1} parent=0 // pred_check_branch
    %11 = sbr.rel (0) target = $region9
  $region8: #{swish.1} parent=0 // pred_region
    _
  $region9: #{swish.1} parent=0 // pred_fallthru
    _
  %s12 = sld [smem:[#allocation2]]
  %s13 = smul.f32 %s12, 0.5
  %v14 = vld [vmem:[%s1] sm:$0xff]
  %v15 = vld [vmem:[%s1 + $0x8] sm:$0xff]
  %v16 = vstv %s13
  %v17 = vmul.f32 %v16, %v14
  %v18 = vmul.f32 %v16, %v15
  %v19 = vtanh.pop %v17
  %v20 = vtanh.pop %v18
  %v21 = vadd.f32 %v19, 1.0
  %v22 = vadd.f32 %v20, 1.0
  %v23 = vmul.f32 %v21, 0.5
  %v24 = vmul.f32 %v22, 0.5
  %v25 = vmul.f32 %v14, %v23
  %v26 = vmul.f32 %v15, %v24
  %27 = vst [vmem:[%s2] sm:$0xff] %v25
  %28 = vst [vmem:[%s2 + $0x8] sm:$0xff] %v26
  // Predicated region
  $region10: #{swish.1} parent=0 // pred_check
    _
  $region11: #{swish.1} parent=0 // pred_check_branch
    %30 = sbr.rel (0) target = $region13
  $region12: #{swish.1} parent=0 // pred_region
    _
  $region13: #{swish.1} parent=0 // pred_fallthru
    _
  // Predicated region
  $region14: #{swish.1} parent=0 // pred_check
    _
  $region15: #{swish.1} parent=0 // pred_check_branch
    %32 = sbr.rel (0) target = $region17
  $region16: #{swish.1} parent=0 // pred_region
    _
  $region17: #{swish.1} parent=0 // pred_fallthru
    _

</llo_original>
